<compile_context>
chip_gen: v7x
topology: tpu7x:2x2x1
jax: 0.10.0
libtpu: 0.0.40
codegen_flags: <defaults>
</compile_context>

<pallas_src>
import numpy as np
import jax
import jax.numpy as jnp
from jax import lax
from jax.experimental import pallas as pl
from jax.experimental.pallas import tpu as pltpu

# ----------------------------- hyper-params ---------------------------------
D = 32        # embedding_dim
R = 4         # n_routes        (R * D = 128 -> one full lane register)
L = 8         # len_max_sentence
VOCAB = 16    # vocab_size
B = 2         # batch size
S = 3         # sentences per story
LANE = 128    # TPU lane width


def _prelu(x, a):
    # nn.PReLU(init=1): max(0,x) + a*min(0,x)
    return jnp.maximum(x, 0.0) + a * jnp.minimum(x, 0.0)


# ------------------------------- kernel -------------------------------------
def routed_network_kernel(x_ref, keys_ref, init_ref, uw_ref, vall_ref,
                          hwt_ref, rwt_ref, q_ref, a_in_ref, a_q_ref, out_ref):
    # x_ref   : (S, Bp, R*D)   encoded sentences (batch padded to Bp)
    # keys_ref: (1, R*D)       flattened route keys
    # init_ref: (1, D)         initial state
    # uw_ref  : (2*R*D, R*D)   fused [Uw.T ; zeros ; Ww.T]
    # vall_ref: (1, R*D)       precomputed V(keys)
    # hwt_ref : (D, D)         H.weight.T
    # rwt_ref : (D, LANE)      R.weight.T zero-padded to 128 lanes
    # q_ref   : (Bp, D)        encoded queries (padded)
    # a_*_ref : (1,) SMEM      PReLU slopes
    # out_ref : (Bp, LANE)
    S_ = x_ref.shape[0]
    Bp = q_ref.shape[0]
    D_ = init_ref.shape[1]
    RD = keys_ref.shape[1]
    R_ = RD // D_

    a_in = a_in_ref[0]
    a_q = a_q_ref[0]

    keys_flat = keys_ref[...]                               # (1, R*D)
    v_all = vall_ref[...]                                   # (1, R*D) loop-invariant

    init_state = jnp.broadcast_to(init_ref[...], (Bp, D_))  # (Bp, D)

    def step(s, state):
        sent = x_ref[s]                                          # (Bp, R*D)
        # replicate state across the R route groups (lane axis)
        state_tiled = jnp.concatenate([state] * R_, axis=1)      # (Bp, R*D)

        # gate at full lane width; z == 0 <=> null (all-padding) sentence slot
        z = sent * (state_tiled + keys_flat)                     # (Bp, R*D)
        gate = jax.nn.sigmoid(z)

        # fused U/W matmul: [state_tiled | sent] @ [Uw.T ; 0 ; Ww.T]
        inp = jnp.concatenate([state_tiled, sent], axis=1)       # (Bp, 2*R*D), 128-aligned
        uw_out = jnp.dot(inp, uw_ref[...],
                         preferred_element_type=jnp.float32)     # (Bp, R*D)

        upd = _prelu(uw_out + v_all, a_in)                       # (Bp, R*D)
        gated = jnp.where(z == 0.0, 0.0, upd * gate)             # mask folded in

        # route reduction via XLU rolls: after log2(R) folds every D-lane
        # group holds the sum over routes.
        y = gated
        folds = R_                                               # power of two
        while folds > 1:
            y = y + pltpu.roll(y, shift=(folds // 2) * D_, axis=1)
            folds //= 2
        delta = y[:, :D_]                                        # (Bp, D)

        new_state = state + delta
        # torch: state / torch.norm(state, dim=1(keep), size-1) == state/|state|
        # == sign(state) element-wise for nonzero state.
        one = jnp.ones_like(new_state)
        return jnp.where(new_state >= 0.0, one, -one)

    state = lax.fori_loop(0, S_, step, init_state, unroll=True)

    h = jnp.dot(state, hwt_ref[...], preferred_element_type=jnp.float32)  # (Bp, D)
    act = _prelu(q_ref[...] + h, a_q)
    out_ref[...] = jnp.dot(act, rwt_ref[...],
                           preferred_element_type=jnp.float32)            # (Bp, LANE)


# --------------------------- one-time weight prep ----------------------------
def prepare_kernel_params(params):
    Dd = params["Hw"].shape[0]
    Rr = params["keys"].shape[0]
    RD = Rr * Dd
    vocab = params["Rw"].shape[0]
    n_out = ((vocab + LANE - 1) // LANE) * LANE

    keys_flat = params["keys"].reshape(1, RD)
    # V(keys.reshape(-1)) is loop invariant -> compute once here.
    v_all = jnp.dot(keys_flat, params["Vw"].T)                  # (1, R*D)

    # Fused U/W weight: input is [state_tiled(128) | sentence(128)].
    # Rows 0:D pick the first state copy; rows D:RD are zero so the other
    # tiled copies contribute exactly 0; rows RD:2*RD consume the sentence.
    uw_pad = jnp.zeros((2 * RD, RD), jnp.float32)
    uw_pad = uw_pad.at[:Dd, :].set(params["Uw"].T)
    uw_pad = uw_pad.at[RD:, :].set(params["Ww"].T)

    # Lane-dense output matmul: pad R.weight.T to 128 output lanes.
    rwt_pad = jnp.zeros((Dd, n_out), jnp.float32)
    rwt_pad = rwt_pad.at[:, :vocab].set(params["Rw"].T)

    return dict(
        emb=params["emb"],
        in_mult=params["in_mult"],
        q_mult=params["q_mult"],
        keys_flat=keys_flat,
        init_state=params["init_state"].reshape(1, Dd),
        uw_pad=uw_pad,
        v_all=v_all,
        hwt=params["Hw"].T,
        rwt_pad=rwt_pad,
        a_in=params["a_in"].reshape(1),
        a_q=params["a_q"].reshape(1),
    )


# ------------------------------- wrapper -------------------------------------
@jax.jit
def routed_network_forward(prep, batch_stories, batch_queries):
    emb = prep["emb"]
    Bb, Ss, LR = batch_stories.shape
    Dd = emb.shape[1]
    RD = prep["keys_flat"].shape[1]
    Rr = RD // Dd
    n_out = prep["rwt_pad"].shape[1]

    # --- glue: embedding lookup (gather) + encoder multiply + route-sum ---
    x = emb[batch_stories] * prep["in_mult"]                # (B, S, L*R, D)
    x = x.reshape(Bb, Ss, Rr, LR // Rr, Dd).sum(axis=3)     # (B, S, R, D)
    x_flat = x.reshape(Bb, Ss, RD).transpose(1, 0, 2)       # (S, B, R*D)

    q_enc = (emb[batch_queries] * prep["q_mult"]).sum(axis=1)   # (B, D)

    # pad batch to a sublane-full multiple of 8 (free: vregs are 8 sublanes)
    Bp = max(8, ((Bb + 7) // 8) * 8)
    x_flat = jnp.pad(x_flat, ((0, 0), (0, Bp - Bb), (0, 0)))
    q_pad = jnp.pad(q_enc, ((0, Bp - Bb), (0, 0)))

    vmem = pl.BlockSpec(memory_space=pltpu.MemorySpace.VMEM)
    smem = pl.BlockSpec(memory_space=pltpu.MemorySpace.SMEM)

    out = pl.pallas_call(
        routed_network_kernel,
        out_shape=jax.ShapeDtypeStruct((Bp, n_out), jnp.float32),
        in_specs=[vmem] * 8 + [smem, smem],
        out_specs=vmem,
    )(x_flat, prep["keys_flat"], prep["init_state"], prep["uw_pad"],
      prep["v_all"], prep["hwt"], prep["rwt_pad"], q_pad,
      prep["a_in"], prep["a_q"])

    # TODO(synk): add a batch grid axis with dimension_semantics=("parallel",)
    # if batch ever scales (v7x has 2 TensorCores); at B=2 it is a no-op.
    return out[:Bb, :VOCAB], None


# -------------------------- pure-JAX reference -------------------------------
def reference_forward(params, batch_stories, batch_queries):
    emb = params["emb"]
    x = emb[batch_stories]
    Bb, Ss, LR, Dd = x.shape
    x = x * params["in_mult"]
    x = x.reshape(Bb, Ss, R, LR // R, Dd).sum(axis=3)       # (B, S, R, D)

    state = jnp.broadcast_to(params["init_state"][None, None, :], (Bb, 1, Dd))
    keys = params["keys"]
    a_in, a_q = params["a_in"], params["a_q"]
    for s in range(Ss):
        sent = x[:, s]                                      # (B, R, D)
        gate = jax.nn.sigmoid(sent * state + sent * keys[None])
        u = (state.reshape(Bb, Dd) @ params["Uw"].T).reshape(Bb, R, Dd)
        v = (keys.reshape(-1) @ params["Vw"].T).reshape(R, Dd)
        w = (sent.reshape(Bb, R * Dd) @ params["Ww"].T).reshape(Bb, R, Dd)
        upd = _prelu(u + v[None] + w, a_in)
        mask = jnp.where(gate == 0.5, 0.0, 1.0)
        state = state + (upd * gate * mask).sum(axis=1, keepdims=True)
        state = state / jnp.abs(state)

    q = (emb[batch_queries] * params["q_mult"]).sum(axis=1)     # (B, D)
    h = state.reshape(Bb, Dd) @ params["Hw"].T
    return _prelu(q + h, a_q) @ params["Rw"].T, None


# ------------------------------ param init -----------------------------------
def init_params(key):
    ks = jax.random.split(key, 8)
    emb = 0.1 * jax.random.normal(ks[0], (VOCAB, D), jnp.float32)
    emb = emb.at[0].set(0.0)   # padding_idx=0 row initialized with std 0
    return dict(
        emb=emb,
        keys=0.1 * jax.random.normal(ks[1], (R, D), jnp.float32),
        init_state=0.1 * jax.random.normal(ks[2], (D,), jnp.float32),
        in_mult=jnp.ones((L * R, D), jnp.float32),
        q_mult=jnp.ones((L, D), jnp.float32),
        Uw=0.1 * jax.random.normal(ks[3], (R * D, D), jnp.float32),
        Vw=0.1 * jax.random.normal(ks[4], (R * D, R * D), jnp.float32),
        Ww=0.1 * jax.random.normal(ks[5], (R * D, R * D), jnp.float32),
        Rw=0.1 * jax.random.normal(ks[6], (VOCAB, D), jnp.float32),
        Hw=0.1 * jax.random.normal(ks[7], (D, D), jnp.float32),
        a_in=jnp.ones((1,), jnp.float32),   # PReLU(init=1)
        a_q=jnp.ones((1,), jnp.float32),
    )


if __name__ == "__main__":
    key = jax.random.PRNGKey(0)
    pk, sk, qk = jax.random.split(key, 3)
    params = init_params(pk)
    prep = prepare_kernel_params(params)

    batch_stories = jax.random.randint(sk, (B, S, L * R), 0, VOCAB, dtype=jnp.int32)
    batch_queries = jax.random.randint(qk, (B, L), 0, VOCAB, dtype=jnp.int32)

    out, _ = routed_network_forward(prep, batch_stories, batch_queries)
    out = jax.block_until_ready(out)

    ref, _ = reference_forward(params, batch_stories, batch_queries)
    ref = jax.block_until_ready(ref)

    np.testing.assert_allclose(np.asarray(out), np.asarray(ref), rtol=2e-2, atol=2e-2)
    print("KERNEL_OK")
</pallas_src>

<mosaic_0001>
module attributes {stable_mosaic.version = 11 : i64} {
  func.func @routed_network_kernel(%arg0: memref<3x8x128xf32, #tpu.memory_space<vmem>>, %arg1: memref<1x128xf32, #tpu.memory_space<vmem>>, %arg2: memref<1x32xf32, #tpu.memory_space<vmem>>, %arg3: memref<256x128xf32, #tpu.memory_space<vmem>>, %arg4: memref<1x128xf32, #tpu.memory_space<vmem>>, %arg5: memref<32x32xf32, #tpu.memory_space<vmem>>, %arg6: memref<32x128xf32, #tpu.memory_space<vmem>>, %arg7: memref<8x32xf32, #tpu.memory_space<vmem>>, %arg8: memref<1xf32, #tpu.memory_space<smem>>, %arg9: memref<1xf32, #tpu.memory_space<smem>>, %arg10: memref<8x128xf32, #tpu.memory_space<vmem>>) attributes {dimension_semantics = [], scalar_prefetch = 0 : i64, scratch_operands = 0 : i64, tpu.core_type = #tpu.core_type<tc>} {
    %c0 = arith.constant 0 : index
    %0 = memref.load %arg8[%c0] : memref<1xf32, #tpu.memory_space<smem>>
    %c0_0 = arith.constant 0 : index
    %1 = memref.load %arg9[%c0_0] : memref<1xf32, #tpu.memory_space<smem>>
    %c0_1 = arith.constant 0 : index
    %c0_2 = arith.constant 0 : index
    %2 = vector.load %arg1[%c0_1, %c0_2] : memref<1x128xf32, #tpu.memory_space<vmem>>, vector<1x128xf32>
    %c0_3 = arith.constant 0 : index
    %c0_4 = arith.constant 0 : index
    %3 = vector.load %arg4[%c0_3, %c0_4] : memref<1x128xf32, #tpu.memory_space<vmem>>, vector<1x128xf32>
    %c0_5 = arith.constant 0 : index
    %c0_6 = arith.constant 0 : index
    %4 = vector.load %arg2[%c0_5, %c0_6] : memref<1x32xf32, #tpu.memory_space<vmem>>, vector<1x32xf32>
    %5 = vector.shape_cast %4 : vector<1x32xf32> to vector<1x32xf32>
    %6 = vector.broadcast %5 : vector<1x32xf32> to vector<8x32xf32>
    %c0_i32 = arith.constant 0 : i32
    %7 = arith.index_cast %c0_i32 : i32 to index
    %c0_7 = arith.constant 0 : index
    %c0_8 = arith.constant 0 : index
    %8 = vector.load %arg0[%7, %c0_7, %c0_8] : memref<3x8x128xf32, #tpu.memory_space<vmem>>, vector<1x8x128xf32>
    %9 = vector.shape_cast %8 : vector<1x8x128xf32> to vector<8x128xf32>
    %10 = tpu.concatenate %6, %6, %6, %6 in 1 : vector<8x32xf32>, vector<8x32xf32>, vector<8x32xf32>, vector<8x32xf32> -> vector<8x128xf32>
    %11 = vector.broadcast %2 : vector<1x128xf32> to vector<8x128xf32>
    %12 = arith.addf %10, %11 : vector<8x128xf32>
    %13 = arith.mulf %9, %12 : vector<8x128xf32>
    %14 = arith.negf %13 : vector<8x128xf32>
    %15 = math.exp %14 : vector<8x128xf32>
    %cst = arith.constant 1.000000e+00 : f32
    %16 = vector.broadcast %cst : f32 to vector<8x128xf32>
    %17 = arith.addf %16, %15 : vector<8x128xf32>
    %18 = arith.divf %16, %17 : vector<8x128xf32>
    %19 = tpu.concatenate %10, %9 in 1 : vector<8x128xf32>, vector<8x128xf32> -> vector<8x256xf32>
    %c0_9 = arith.constant 0 : index
    %c0_10 = arith.constant 0 : index
    %20 = vector.load %arg3[%c0_9, %c0_10] : memref<256x128xf32, #tpu.memory_space<vmem>>, vector<256x128xf32>
    %cst_11 = arith.constant dense<0.000000e+00> : vector<8x128xf32>
    %21 = tpu.matmul %19, %20, %cst_11 {dimension_numbers = #tpu.dot_dimension_numbers<[1], [0], [0], [1], [0, 0, 1, 1], [], []>} : vector<8x256xf32>, vector<256x128xf32>, vector<8x128xf32> -> vector<8x128xf32>
    %22 = vector.broadcast %3 : vector<1x128xf32> to vector<8x128xf32>
    %23 = arith.addf %21, %22 : vector<8x128xf32>
    %cst_12 = arith.constant 0.000000e+00 : f32
    %24 = vector.broadcast %cst_12 : f32 to vector<8x128xf32>
    %25 = arith.maximumf %23, %24 : vector<8x128xf32>
    %cst_13 = arith.constant 0.000000e+00 : f32
    %26 = vector.broadcast %cst_13 : f32 to vector<8x128xf32>
    %27 = arith.minimumf %23, %26 : vector<8x128xf32>
    %28 = vector.broadcast %0 : f32 to vector<8x128xf32>
    %29 = arith.mulf %28, %27 : vector<8x128xf32>
    %30 = arith.addf %25, %29 : vector<8x128xf32>
    %cst_14 = arith.constant 0.000000e+00 : f32
    %31 = vector.broadcast %cst_14 : f32 to vector<8x128xf32>
    %32 = arith.cmpf oeq, %13, %31 : vector<8x128xf32>
    %33 = arith.mulf %30, %18 : vector<8x128xf32>
    %cst_15 = arith.constant 0.000000e+00 : f32
    %34 = vector.broadcast %cst_15 : f32 to vector<8x128xf32>
    %35 = arith.select %32, %34, %33 : vector<8x128xi1>, vector<8x128xf32>
    %c64_i32 = arith.constant 64 : i32
    %36 = tpu.dynamic_rotate %35 by %c64_i32 dim 1 : vector<8x128xf32>, i32 -> vector<8x128xf32>
    %37 = arith.addf %35, %36 : vector<8x128xf32>
    %c32_i32 = arith.constant 32 : i32
    %38 = tpu.dynamic_rotate %37 by %c32_i32 dim 1 : vector<8x128xf32>, i32 -> vector<8x128xf32>
    %39 = arith.addf %37, %38 : vector<8x128xf32>
    %40 = vector.extract_strided_slice %39 {offsets = [0, 0], sizes = [8, 32], strides = [1, 1]} : vector<8x128xf32> to vector<8x32xf32>
    %41 = arith.addf %6, %40 : vector<8x32xf32>
    %cst_16 = arith.constant 1.000000e+00 : f32
    %42 = vector.broadcast %cst_16 : f32 to vector<8x32xf32>
    %cst_17 = arith.constant 0.000000e+00 : f32
    %43 = vector.broadcast %cst_17 : f32 to vector<8x32xf32>
    %44 = arith.cmpf oge, %41, %43 : vector<8x32xf32>
    %cst_18 = arith.constant 0.000000e+00 : f32
    %45 = vector.broadcast %cst_18 : f32 to vector<8x32xf32>
    %46 = arith.subf %45, %42 : vector<8x32xf32>
    %47 = arith.select %44, %42, %46 : vector<8x32xi1>, vector<8x32xf32>
    %c1_i32 = arith.constant 1 : i32
    %48 = arith.index_cast %c1_i32 : i32 to index
    %c0_19 = arith.constant 0 : index
    %c0_20 = arith.constant 0 : index
    %49 = vector.load %arg0[%48, %c0_19, %c0_20] : memref<3x8x128xf32, #tpu.memory_space<vmem>>, vector<1x8x128xf32>
    %50 = vector.shape_cast %49 : vector<1x8x128xf32> to vector<8x128xf32>
    %51 = tpu.concatenate %47, %47, %47, %47 in 1 : vector<8x32xf32>, vector<8x32xf32>, vector<8x32xf32>, vector<8x32xf32> -> vector<8x128xf32>
    %52 = vector.broadcast %2 : vector<1x128xf32> to vector<8x128xf32>
    %53 = arith.addf %51, %52 : vector<8x128xf32>
    %54 = arith.mulf %50, %53 : vector<8x128xf32>
    %55 = arith.negf %54 : vector<8x128xf32>
    %56 = math.exp %55 : vector<8x128xf32>
    %cst_21 = arith.constant 1.000000e+00 : f32
    %57 = vector.broadcast %cst_21 : f32 to vector<8x128xf32>
    %58 = arith.addf %57, %56 : vector<8x128xf32>
    %59 = arith.divf %57, %58 : vector<8x128xf32>
    %60 = tpu.concatenate %51, %50 in 1 : vector<8x128xf32>, vector<8x128xf32> -> vector<8x256xf32>
    %c0_22 = arith.constant 0 : index
    %c0_23 = arith.constant 0 : index
    %61 = vector.load %arg3[%c0_22, %c0_23] : memref<256x128xf32, #tpu.memory_space<vmem>>, vector<256x128xf32>
    %cst_24 = arith.constant dense<0.000000e+00> : vector<8x128xf32>
    %62 = tpu.matmul %60, %61, %cst_24 {dimension_numbers = #tpu.dot_dimension_numbers<[1], [0], [0], [1], [0, 0, 1, 1], [], []>} : vector<8x256xf32>, vector<256x128xf32>, vector<8x128xf32> -> vector<8x128xf32>
    %63 = vector.broadcast %3 : vector<1x128xf32> to vector<8x128xf32>
    %64 = arith.addf %62, %63 : vector<8x128xf32>
    %cst_25 = arith.constant 0.000000e+00 : f32
    %65 = vector.broadcast %cst_25 : f32 to vector<8x128xf32>
    %66 = arith.maximumf %64, %65 : vector<8x128xf32>
    %cst_26 = arith.constant 0.000000e+00 : f32
    %67 = vector.broadcast %cst_26 : f32 to vector<8x128xf32>
    %68 = arith.minimumf %64, %67 : vector<8x128xf32>
    %69 = vector.broadcast %0 : f32 to vector<8x128xf32>
    %70 = arith.mulf %69, %68 : vector<8x128xf32>
    %71 = arith.addf %66, %70 : vector<8x128xf32>
    %cst_27 = arith.constant 0.000000e+00 : f32
    %72 = vector.broadcast %cst_27 : f32 to vector<8x128xf32>
    %73 = arith.cmpf oeq, %54, %72 : vector<8x128xf32>
    %74 = arith.mulf %71, %59 : vector<8x128xf32>
    %cst_28 = arith.constant 0.000000e+00 : f32
    %75 = vector.broadcast %cst_28 : f32 to vector<8x128xf32>
    %76 = arith.select %73, %75, %74 : vector<8x128xi1>, vector<8x128xf32>
    %c64_i32_29 = arith.constant 64 : i32
    %77 = tpu.dynamic_rotate %76 by %c64_i32_29 dim 1 : vector<8x128xf32>, i32 -> vector<8x128xf32>
    %78 = arith.addf %76, %77 : vector<8x128xf32>
    %c32_i32_30 = arith.constant 32 : i32
    %79 = tpu.dynamic_rotate %78 by %c32_i32_30 dim 1 : vector<8x128xf32>, i32 -> vector<8x128xf32>
    %80 = arith.addf %78, %79 : vector<8x128xf32>
    %81 = vector.extract_strided_slice %80 {offsets = [0, 0], sizes = [8, 32], strides = [1, 1]} : vector<8x128xf32> to vector<8x32xf32>
    %82 = arith.addf %47, %81 : vector<8x32xf32>
    %cst_31 = arith.constant 1.000000e+00 : f32
    %83 = vector.broadcast %cst_31 : f32 to vector<8x32xf32>
    %cst_32 = arith.constant 0.000000e+00 : f32
    %84 = vector.broadcast %cst_32 : f32 to vector<8x32xf32>
    %85 = arith.cmpf oge, %82, %84 : vector<8x32xf32>
    %cst_33 = arith.constant 0.000000e+00 : f32
    %86 = vector.broadcast %cst_33 : f32 to vector<8x32xf32>
    %87 = arith.subf %86, %83 : vector<8x32xf32>
    %88 = arith.select %85, %83, %87 : vector<8x32xi1>, vector<8x32xf32>
    %c2_i32 = arith.constant 2 : i32
    %89 = arith.index_cast %c2_i32 : i32 to index
    %c0_34 = arith.constant 0 : index
    %c0_35 = arith.constant 0 : index
    %90 = vector.load %arg0[%89, %c0_34, %c0_35] : memref<3x8x128xf32, #tpu.memory_space<vmem>>, vector<1x8x128xf32>
    %91 = vector.shape_cast %90 : vector<1x8x128xf32> to vector<8x128xf32>
    %92 = tpu.concatenate %88, %88, %88, %88 in 1 : vector<8x32xf32>, vector<8x32xf32>, vector<8x32xf32>, vector<8x32xf32> -> vector<8x128xf32>
    %93 = vector.broadcast %2 : vector<1x128xf32> to vector<8x128xf32>
    %94 = arith.addf %92, %93 : vector<8x128xf32>
    %95 = arith.mulf %91, %94 : vector<8x128xf32>
    %96 = arith.negf %95 : vector<8x128xf32>
    %97 = math.exp %96 : vector<8x128xf32>
    %cst_36 = arith.constant 1.000000e+00 : f32
    %98 = vector.broadcast %cst_36 : f32 to vector<8x128xf32>
    %99 = arith.addf %98, %97 : vector<8x128xf32>
    %100 = arith.divf %98, %99 : vector<8x128xf32>
    %101 = tpu.concatenate %92, %91 in 1 : vector<8x128xf32>, vector<8x128xf32> -> vector<8x256xf32>
    %c0_37 = arith.constant 0 : index
    %c0_38 = arith.constant 0 : index
    %102 = vector.load %arg3[%c0_37, %c0_38] : memref<256x128xf32, #tpu.memory_space<vmem>>, vector<256x128xf32>
    %cst_39 = arith.constant dense<0.000000e+00> : vector<8x128xf32>
    %103 = tpu.matmul %101, %102, %cst_39 {dimension_numbers = #tpu.dot_dimension_numbers<[1], [0], [0], [1], [0, 0, 1, 1], [], []>} : vector<8x256xf32>, vector<256x128xf32>, vector<8x128xf32> -> vector<8x128xf32>
    %104 = vector.broadcast %3 : vector<1x128xf32> to vector<8x128xf32>
    %105 = arith.addf %103, %104 : vector<8x128xf32>
    %cst_40 = arith.constant 0.000000e+00 : f32
    %106 = vector.broadcast %cst_40 : f32 to vector<8x128xf32>
    %107 = arith.maximumf %105, %106 : vector<8x128xf32>
    %cst_41 = arith.constant 0.000000e+00 : f32
    %108 = vector.broadcast %cst_41 : f32 to vector<8x128xf32>
    %109 = arith.minimumf %105, %108 : vector<8x128xf32>
    %110 = vector.broadcast %0 : f32 to vector<8x128xf32>
    %111 = arith.mulf %110, %109 : vector<8x128xf32>
    %112 = arith.addf %107, %111 : vector<8x128xf32>
    %cst_42 = arith.constant 0.000000e+00 : f32
    %113 = vector.broadcast %cst_42 : f32 to vector<8x128xf32>
    %114 = arith.cmpf oeq, %95, %113 : vector<8x128xf32>
    %115 = arith.mulf %112, %100 : vector<8x128xf32>
    %cst_43 = arith.constant 0.000000e+00 : f32
    %116 = vector.broadcast %cst_43 : f32 to vector<8x128xf32>
    %117 = arith.select %114, %116, %115 : vector<8x128xi1>, vector<8x128xf32>
    %c64_i32_44 = arith.constant 64 : i32
    %118 = tpu.dynamic_rotate %117 by %c64_i32_44 dim 1 : vector<8x128xf32>, i32 -> vector<8x128xf32>
    %119 = arith.addf %117, %118 : vector<8x128xf32>
    %c32_i32_45 = arith.constant 32 : i32
    %120 = tpu.dynamic_rotate %119 by %c32_i32_45 dim 1 : vector<8x128xf32>, i32 -> vector<8x128xf32>
    %121 = arith.addf %119, %120 : vector<8x128xf32>
    %122 = vector.extract_strided_slice %121 {offsets = [0, 0], sizes = [8, 32], strides = [1, 1]} : vector<8x128xf32> to vector<8x32xf32>
    %123 = arith.addf %88, %122 : vector<8x32xf32>
    %cst_46 = arith.constant 1.000000e+00 : f32
    %124 = vector.broadcast %cst_46 : f32 to vector<8x32xf32>
    %cst_47 = arith.constant 0.000000e+00 : f32
    %125 = vector.broadcast %cst_47 : f32 to vector<8x32xf32>
    %126 = arith.cmpf oge, %123, %125 : vector<8x32xf32>
    %cst_48 = arith.constant 0.000000e+00 : f32
    %127 = vector.broadcast %cst_48 : f32 to vector<8x32xf32>
    %128 = arith.subf %127, %124 : vector<8x32xf32>
    %129 = arith.select %126, %124, %128 : vector<8x32xi1>, vector<8x32xf32>
    %c3_i32 = arith.constant 3 : i32
    %c0_49 = arith.constant 0 : index
    %c0_50 = arith.constant 0 : index
    %130 = vector.load %arg5[%c0_49, %c0_50] : memref<32x32xf32, #tpu.memory_space<vmem>>, vector<32x32xf32>
    %cst_51 = arith.constant dense<0.000000e+00> : vector<8x32xf32>
    %131 = tpu.matmul %129, %130, %cst_51 {dimension_numbers = #tpu.dot_dimension_numbers<[1], [0], [0], [1], [0, 0, 1, 1], [], []>} : vector<8x32xf32>, vector<32x32xf32>, vector<8x32xf32> -> vector<8x32xf32>
    %c0_52 = arith.constant 0 : index
    %c0_53 = arith.constant 0 : index
    %132 = vector.load %arg7[%c0_52, %c0_53] : memref<8x32xf32, #tpu.memory_space<vmem>>, vector<8x32xf32>
    %133 = arith.addf %132, %131 : vector<8x32xf32>
    %cst_54 = arith.constant 0.000000e+00 : f32
    %134 = vector.broadcast %cst_54 : f32 to vector<8x32xf32>
    %135 = arith.maximumf %133, %134 : vector<8x32xf32>
    %cst_55 = arith.constant 0.000000e+00 : f32
    %136 = vector.broadcast %cst_55 : f32 to vector<8x32xf32>
    %137 = arith.minimumf %133, %136 : vector<8x32xf32>
    %138 = vector.broadcast %1 : f32 to vector<8x32xf32>
    %139 = arith.mulf %138, %137 : vector<8x32xf32>
    %140 = arith.addf %135, %139 : vector<8x32xf32>
    %c0_56 = arith.constant 0 : index
    %c0_57 = arith.constant 0 : index
    %141 = vector.load %arg6[%c0_56, %c0_57] : memref<32x128xf32, #tpu.memory_space<vmem>>, vector<32x128xf32>
    %cst_58 = arith.constant dense<0.000000e+00> : vector<8x128xf32>
    %142 = tpu.matmul %140, %141, %cst_58 {dimension_numbers = #tpu.dot_dimension_numbers<[1], [0], [0], [1], [0, 0, 1, 1], [], []>} : vector<8x32xf32>, vector<32x128xf32>, vector<8x128xf32> -> vector<8x128xf32>
    %c0_59 = arith.constant 0 : index
    %c0_60 = arith.constant 0 : index
    %143 = vector.load %arg10[%c0_59, %c0_60] : memref<8x128xf32, #tpu.memory_space<vmem>>, vector<8x128xf32>
    tpu.vector_store %arg10[%c0_59, %c0_60], %142 {strides = array<i32>} : memref<8x128xf32, #tpu.memory_space<vmem>>, vector<8x128xf32>,
    return
  }
}

</mosaic_0001>

<llo_original>
// kernel: routed_network_forward.1
$region0: #{routed_network_forward.1}
  #allocation0 [shape = 'u32[]', space=smem, size = 0x4, offset = 0x4, fixed_abs, tag = 'smem constant byte address 0x4 - core index']
  #allocation1 [shape = 'u32[144,128]{1,0:T(1,128)}', space=vmem, size = 0x12000, scoped, tag = 'internal scratch']
  #allocation2 [shape = 'f32[1]{0:T(128)S(6)}', space=smem, size = 0x200, scoped, tag = 'scoped memory for routed_network_forward.1']
  #allocation3 [shape = 'f32[1]{0:T(128)S(6)}', space=smem, size = 0x200, scoped, tag = 'scoped memory for routed_network_forward.1']
  %s0 = inlined_call_operand.vmem [shape: f32[3,8,128], index: 0, kind: input, shape index: {}]
  %s1 = inlined_call_operand.vmem [shape: f32[1,128], index: 1, kind: input, shape index: {}]
  %s2 = inlined_call_operand.vmem [shape: f32[1,32], index: 2, kind: input, shape index: {}]
  %s3 = inlined_call_operand.vmem [shape: f32[256,128], index: 3, kind: input, shape index: {}]
  %s4 = inlined_call_operand.vmem [shape: f32[1,128], index: 4, kind: input, shape index: {}]
  %s5 = inlined_call_operand.vmem [shape: f32[32,32], index: 5, kind: input, shape index: {}]
  %s6 = inlined_call_operand.vmem [shape: f32[32,128], index: 6, kind: input, shape index: {}]
  %s7 = inlined_call_operand.vmem [shape: f32[8,32], index: 7, kind: input, shape index: {}]
  %s8 = inlined_call_operand.<no memory space> [shape: f32[1], index: 8, kind: input, shape index: {}]
  %s9 = inlined_call_operand.<no memory space> [shape: f32[1], index: 9, kind: input, shape index: {}]
  %s10 = inlined_call_operand.vmem [shape: f32[8,128], index: 10, kind: output, shape index: {}]
  %s11 = sld [smem:[#allocation0]]
  $region50: #{routed_network_forward.1} parent=0
    _
  %s13 = ssub.s32 1, %s11
  %s14 = scalar_select 0, %s13, %s11
  %15 = sst [smem:[#allocation2]] %s8
  %16 = sst [smem:[#allocation3]] %s9
  // Predicated region
  $region2: #{routed_network_forward.1} parent=0 // pred_check
    _
  $region3: #{routed_network_forward.1} parent=0 // pred_check_branch
    %18 = sbr.rel (0) target = $region5
  $region4: #{routed_network_forward.1} parent=0 // pred_region
    _
  $region5: #{routed_network_forward.1} parent=0 // pred_fallthru
    _
  // Predicated region
  $region6: #{routed_network_forward.1} parent=0 // pred_check
    _
  $region7: #{routed_network_forward.1} parent=0 // pred_check_branch
    %20 = sbr.rel (0) target = $region9
  $region8: #{routed_network_forward.1} parent=0 // pred_region
    _
  $region9: #{routed_network_forward.1} parent=0 // pred_fallthru
    _
  // Predicated region
  $region10: #{routed_network_forward.1} parent=0 // pred_check
    _
  $region11: #{routed_network_forward.1} parent=0 // pred_check_branch
    %22 = sbr.rel (0) target = $region13
  $region12: #{routed_network_forward.1} parent=0 // pred_region
    _
  $region13: #{routed_network_forward.1} parent=0 // pred_fallthru
    _
  // Predicated region
  $region14: #{routed_network_forward.1} parent=0 // pred_check
    _
  $region15: #{routed_network_forward.1} parent=0 // pred_check_branch
    %24 = sbr.rel (0) target = $region17
  $region16: #{routed_network_forward.1} parent=0 // pred_region
    _
  $region17: #{routed_network_forward.1} parent=0 // pred_fallthru
    _
  // Predicated region
  $region18: #{routed_network_forward.1} parent=0 // pred_check
    _
  $region19: #{routed_network_forward.1} parent=0 // pred_check_branch
    %26 = sbr.rel (0) target = $region21
  $region20: #{routed_network_forward.1} parent=0 // pred_region
    _
  $region21: #{routed_network_forward.1} parent=0 // pred_fallthru
    _
  // Predicated region
  $region22: #{routed_network_forward.1} parent=0 // pred_check
    _
  $region23: #{routed_network_forward.1} parent=0 // pred_check_branch
    %28 = sbr.rel (0) target = $region25
  $region24: #{routed_network_forward.1} parent=0 // pred_region
    _
  $region25: #{routed_network_forward.1} parent=0 // pred_fallthru
    _
  // Predicated region
  $region26: #{routed_network_forward.1} parent=0 // pred_check
    _
  $region27: #{routed_network_forward.1} parent=0 // pred_check_branch
    %30 = sbr.rel (0) target = $region29
  $region28: #{routed_network_forward.1} parent=0 // pred_region
    _
  $region29: #{routed_network_forward.1} parent=0 // pred_fallthru
    _
  // Predicated region
  $region30: #{routed_network_forward.1} parent=0 // pred_check
    _
  $region31: #{routed_network_forward.1} parent=0 // pred_check_branch
    %32 = sbr.rel (0) target = $region33
  $region32: #{routed_network_forward.1} parent=0 // pred_region
    _
  $region33: #{routed_network_forward.1} parent=0 // pred_fallthru
    _
  // Predicated region
  $region34: #{routed_network_forward.1} parent=0 // pred_check
    _
  $region35: #{routed_network_forward.1} parent=0 // pred_check_branch
    %34 = sbr.rel (0) target = $region37
  $region36: #{routed_network_forward.1} parent=0 // pred_region
    _
  $region37: #{routed_network_forward.1} parent=0 // pred_fallthru
    _
  // Predicated region
  $region38: #{routed_network_forward.1} parent=0 // pred_check
    _
  $region39: #{routed_network_forward.1} parent=0 // pred_check_branch
    %36 = sbr.rel (0) target = $region41
  $region40: #{routed_network_forward.1} parent=0 // pred_region
    _
  $region41: #{routed_network_forward.1} parent=0 // pred_fallthru
    _
  %s37 = sld [smem:[#allocation2]]
  %s38 = sld [smem:[#allocation3]]
  %v39 = vld [vmem:[%s1] sm:$0x1]
  %v40 = vld [vmem:[%s4] sm:$0x1]
  %v41 = vld [vmem:[%s2] sm:$0x1]
  %v43 = vlaneseq
  %v44 = vshrl.u32 %v43, 7
  %v45 = vsub.s32 0, %v44
  %v46 = vrot.slane %v41, %v45
  %v48 = vld [vmem:[%s0] sm:$0xff]
  %49 = vrot.lane.b32.xlu0 %v46, 32
  %v50 = vpop.permute.xlu0 %49
  %52 = vrot.lane.b32.xlu0 %v46, 64
  %v53 = vpop.permute.xlu0 %52
  %55 = vrot.lane.b32.xlu0 %v46, 96
  %v56 = vpop.permute.xlu0 %55
  %vm58 = vcmask 261120
  %v59 = vsel %vm58, %v46, %v50
  %vm60 = vcmask 523264
  %v61 = vsel %vm60, %v59, %v53
  %vm62 = vcmask 785408
  %v63 = vsel %vm62, %v61, %v56
  %v65 = vlaneseq
  %v66 = vshrl.u32 %v65, 7
  %v67 = vsub.s32 0, %v66
  %v68 = vrot.slane %v39, %v67
  %v70 = vadd.f32 %v63, %v68
  %v71 = vmul.f32 %v48, %v70
  %v72 = vxor.u32 %v71, 2147483648
  %v73 = vmul.f32 %v72, 1.442695
  %v74 = vpow.pop %v73
  %v75 = vadd.f32 %v74, 1.0
  %v76 = vrcp.pop %v75
  %v77 = vmul.f32 1.0, %v76
  %v78 = vld [vmem:[%s3] sm:$0xff]
  %v79 = vld [vmem:[%s3 + $0x8] sm:$0xff]
  %v80 = vld [vmem:[%s3 + $0x10] sm:$0xff]
  %v81 = vld [vmem:[%s3 + $0x18] sm:$0xff]
  %v82 = vld [vmem:[%s3 + $0x20] sm:$0xff]
  %v83 = vld [vmem:[%s3 + $0x28] sm:$0xff]
  %v84 = vld [vmem:[%s3 + $0x30] sm:$0xff]
  %v85 = vld [vmem:[%s3 + $0x38] sm:$0xff]
  %v86 = vld [vmem:[%s3 + $0x40] sm:$0xff]
  %v87 = vld [vmem:[%s3 + $0x48] sm:$0xff]
  %v88 = vld [vmem:[%s3 + $0x50] sm:$0xff]
  %v89 = vld [vmem:[%s3 + $0x58] sm:$0xff]
  %v90 = vld [vmem:[%s3 + $0x60] sm:$0xff]
  %v91 = vld [vmem:[%s3 + $0x68] sm:$0xff]
  %v92 = vld [vmem:[%s3 + $0x70] sm:$0xff]
  %v93 = vld [vmem:[%s3 + $0x78] sm:$0xff]
  %v94 = vld [vmem:[%s3 + $0x80] sm:$0xff]
  %v95 = vld [vmem:[%s3 + $0x88] sm:$0xff]
  %v96 = vld [vmem:[%s3 + $0x90] sm:$0xff]
  %v97 = vld [vmem:[%s3 + $0x98] sm:$0xff]
  %v98 = vld [vmem:[%s3 + $0xa0] sm:$0xff]
  %v99 = vld [vmem:[%s3 + $0xa8] sm:$0xff]
  %v100 = vld [vmem:[%s3 + $0xb0] sm:$0xff]
  %v101 = vld [vmem:[%s3 + $0xb8] sm:$0xff]
  %v102 = vld [vmem:[%s3 + $0xc0] sm:$0xff]
  %v103 = vld [vmem:[%s3 + $0xc8] sm:$0xff]
  %v104 = vld [vmem:[%s3 + $0xd0] sm:$0xff]
  %v105 = vld [vmem:[%s3 + $0xd8] sm:$0xff]
  %v106 = vld [vmem:[%s3 + $0xe0] sm:$0xff]
  %v107 = vld [vmem:[%s3 + $0xe8] sm:$0xff]
  %v108 = vld [vmem:[%s3 + $0xf0] sm:$0xff]
  %v109 = vld [vmem:[%s3 + $0xf8] sm:$0xff]
  %v111 = vlaneseq
  %v112 = vshrl.u32 %v111, 7
  %v113 = vsub.s32 0, %v112
  %v114 = vrot.slane %v40, %v113
  %116 = vmatprep.subr.mxu0 0.0
  %117 = vmatpush1.msra.mxu0 %v78
  %118 = vmatprep.subr.mxu0 0.0
  %119 = vmatpush1.msra.mxu0 %v79
  %120 = vmatprep.subr.mxu0 0.0
  %121 = vmatpush1.msra.mxu0 %v80
  %122 = vmatprep.subr.mxu0 0.0
  %123 = vmatpush1.msra.mxu0 %v81
  %124 = vmatprep.subr.mxu0 0.0
  %125 = vmatpush1.msra.mxu0 %v82
  %126 = vmatprep.subr.mxu0 0.0
  %127 = vmatpush1.msra.mxu0 %v83
  %128 = vmatprep.subr.mxu0 0.0
  %129 = vmatpush1.msra.mxu0 %v84
  %130 = vmatprep.subr.mxu0 0.0
  %131 = vmatpush1.msra.mxu0 %v85
  %132 = vmatprep.subr.mxu0 0.0
  %133 = vmatpush1.msra.mxu0 %v86
  %134 = vmatprep.subr.mxu0 0.0
  %135 = vmatpush1.msra.mxu0 %v87
  %136 = vmatprep.subr.mxu0 0.0
  %137 = vmatpush1.msra.mxu0 %v88
  %138 = vmatprep.subr.mxu0 0.0
  %139 = vmatpush1.msra.mxu0 %v89
  %140 = vmatprep.subr.mxu0 0.0
  %141 = vmatpush1.msra.mxu0 %v90
  %142 = vmatprep.subr.mxu0 0.0
  %143 = vmatpush1.msra.mxu0 %v91
  %144 = vmatprep.subr.mxu0 0.0
  %145 = vmatpush1.msra.mxu0 %v92
  %146 = vmatprep.subr.mxu0 0.0
  %147 = vmatpush1.msra.mxu0 %v93
  %148 = vmatprep.subr.mxu0 0.0
  %149 = vmatpush1.msra.mxu0 %v94
  %150 = vmatprep.subr.mxu0 0.0
  %151 = vmatpush1.msra.mxu0 %v95
  %152 = vmatprep.subr.mxu0 0.0
  %153 = vmatpush1.msra.mxu0 %v96
  %154 = vmatprep.subr.mxu0 0.0
  %155 = vmatpush1.msra.mxu0 %v97
  %156 = vmatprep.subr.mxu0 0.0
  %157 = vmatpush1.msra.mxu0 %v98
  %158 = vmatprep.subr.mxu0 0.0
  %159 = vmatpush1.msra.mxu0 %v99
  %160 = vmatprep.subr.mxu0 0.0
  %161 = vmatpush1.msra.mxu0 %v100
  %162 = vmatprep.subr.mxu0 0.0
  %163 = vmatpush1.msra.mxu0 %v101
  %164 = vmatprep.subr.mxu0 0.0
  %165 = vmatpush1.msra.mxu0 %v102
  %166 = vmatprep.subr.mxu0 0.0
  %167 = vmatpush1.msra.mxu0 %v103
  %168 = vmatprep.subr.mxu0 0.0
  %169 = vmatpush1.msra.mxu0 %v104
  %170 = vmatprep.subr.mxu0 0.0
  %171 = vmatpush1.msra.mxu0 %v105
  %172 = vmatprep.subr.mxu0 0.0
  %173 = vmatpush1.msra.mxu0 %v106
  %174 = vmatprep.subr.mxu0 0.0
  %175 = vmatpush1.msra.mxu0 %v107
  %176 = vmatprep.subr.mxu0 0.0
  %177 = vmatpush1.msra.mxu0 %v108
  %178 = vmatprep.subr.mxu0 0.0
  %179 = vmatpush1.msra.mxu0 %v109
  %180 = vmatprep.mubr.f32.mxu0 %v48
  %181 = vmatmul.mubr.f32.gmra.mrb[0].mxu0 %v63
  %v182 = vpop.f32.mrb[0].mxu0
  %v183 = vadd.f32 %v114, %v182
  %v184 = vpop.f32.mrb[0].mxu0
  %185 = vdwg.mxu0
  %v186 = vmax.f32 %v183, 0.0
  %v187 = vmin.f32 %v183, 0.0
  %v188 = vstv %s37
  %v189 = vmul.f32 %v188, %v187
  %v190 = vadd.f32 %v186, %v189
  %vm191 = vcmp.eq.f32.partialorder %v71, 0.0
  %v192 = vmul.f32 %v190, %v77
  %v193 = vsel %vm191, 0.0, %v192
  %194 = vrot.lane.b32.xlu0 %v193, 64
  %v195 = vpop.permute.xlu0 %194
  %v196 = vadd.f32 %v193, %v195
  %197 = vrot.lane.b32.xlu0 %v196, 32
  %v198 = vpop.permute.xlu0 %197
  %v199 = vadd.f32 %v196, %v198
  %v200 = vadd.f32 %v46, %v199
  %vm201 = vcmp.ge.f32.partialorder %v200, 0.0
  %v202 = vsel %vm201, 1.0, -1.0
  %s203 = scalar_lea.vmem %s0, 8
  %v204 = vld [vmem:[%s203] sm:$0xff]
  %206 = vrot.lane.b32.xlu0 %v202, 32
  %v207 = vpop.permute.xlu0 %206
  %209 = vrot.lane.b32.xlu0 %v202, 64
  %v210 = vpop.permute.xlu0 %209
  %212 = vrot.lane.b32.xlu0 %v202, 96
  %v213 = vpop.permute.xlu0 %212
  %v215 = vsel %vm58, %v202, %v207
  %v216 = vsel %vm60, %v215, %v210
  %v217 = vsel %vm62, %v216, %v213
  %v218 = vadd.f32 %v217, %v68
  %v219 = vmul.f32 %v204, %v218
  %v220 = vxor.u32 %v219, 2147483648
  %v221 = vmul.f32 %v220, 1.442695
  %v222 = vpow.pop %v221
  %v223 = vadd.f32 %v222, 1.0
  %v224 = vrcp.pop %v223
  %v225 = vmul.f32 1.0, %v224
  %226 = vmatprep.subr.mxu0 0.0
  %227 = vmatpush1.msra.mxu0 %v78
  %228 = vmatprep.subr.mxu0 0.0
  %229 = vmatpush1.msra.mxu0 %v79
  %230 = vmatprep.subr.mxu0 0.0
  %231 = vmatpush1.msra.mxu0 %v80
  %232 = vmatprep.subr.mxu0 0.0
  %233 = vmatpush1.msra.mxu0 %v81
  %234 = vmatprep.subr.mxu0 0.0
  %235 = vmatpush1.msra.mxu0 %v82
  %236 = vmatprep.subr.mxu0 0.0
  %237 = vmatpush1.msra.mxu0 %v83
  %238 = vmatprep.subr.mxu0 0.0
  %239 = vmatpush1.msra.mxu0 %v84
  %240 = vmatprep.subr.mxu0 0.0
  %241 = vmatpush1.msra.mxu0 %v85
  %242 = vmatprep.subr.mxu0 0.0
  %243 = vmatpush1.msra.mxu0 %v86
  %244 = vmatprep.subr.mxu0 0.0
  %245 = vmatpush1.msra.mxu0 %v87
  %246 = vmatprep.subr.mxu0 0.0
  %247 = vmatpush1.msra.mxu0 %v88
  %248 = vmatprep.subr.mxu0 0.0
  %249 = vmatpush1.msra.mxu0 %v89
  %250 = vmatprep.subr.mxu0 0.0
  %251 = vmatpush1.msra.mxu0 %v90
  %252 = vmatprep.subr.mxu0 0.0
  %253 = vmatpush1.msra.mxu0 %v91
  %254 = vmatprep.subr.mxu0 0.0
  %255 = vmatpush1.msra.mxu0 %v92
  %256 = vmatprep.subr.mxu0 0.0
  %257 = vmatpush1.msra.mxu0 %v93
  %258 = vmatprep.subr.mxu0 0.0
  %259 = vmatpush1.msra.mxu0 %v94
  %260 = vmatprep.subr.mxu0 0.0
  %261 = vmatpush1.msra.mxu0 %v95
  %262 = vmatprep.subr.mxu0 0.0
  %263 = vmatpush1.msra.mxu0 %v96
  %264 = vmatprep.subr.mxu0 0.0
  %265 = vmatpush1.msra.mxu0 %v97
  %266 = vmatprep.subr.mxu0 0.0
  %267 = vmatpush1.msra.mxu0 %v98
  %268 = vmatprep.subr.mxu0 0.0
  %269 = vmatpush1.msra.mxu0 %v99
  %270 = vmatprep.subr.mxu0 0.0
  %271 = vmatpush1.msra.mxu0 %v100
  %272 = vmatprep.subr.mxu0 0.0
  %273 = vmatpush1.msra.mxu0 %v101
  %274 = vmatprep.subr.mxu0 0.0
  %275 = vmatpush1.msra.mxu0 %v102
  %276 = vmatprep.subr.mxu0 0.0
  %277 = vmatpush1.msra.mxu0 %v103
  %278 = vmatprep.subr.mxu0 0.0
  %279 = vmatpush1.msra.mxu0 %v104
  %280 = vmatprep.subr.mxu0 0.0
  %281 = vmatpush1.msra.mxu0 %v105
  %282 = vmatprep.subr.mxu0 0.0
  %283 = vmatpush1.msra.mxu0 %v106
  %284 = vmatprep.subr.mxu0 0.0
  %285 = vmatpush1.msra.mxu0 %v107
  %286 = vmatprep.subr.mxu0 0.0
  %287 = vmatpush1.msra.mxu0 %v108
  %288 = vmatprep.subr.mxu0 0.0
  %289 = vmatpush1.msra.mxu0 %v109
  %290 = vmatprep.mubr.f32.mxu0 %v204
  %291 = vmatmul.mubr.f32.gmra.mrb[0].mxu0 %v217
  %v292 = vpop.f32.mrb[0].mxu0
  %v293 = vadd.f32 %v114, %v292
  %v294 = vpop.f32.mrb[0].mxu0
  %295 = vdwg.mxu0
  %v296 = vmax.f32 %v293, 0.0
  %v297 = vmin.f32 %v293, 0.0
  %v298 = vmul.f32 %v188, %v297
  %v299 = vadd.f32 %v296, %v298
  %vm300 = vcmp.eq.f32.partialorder %v219, 0.0
  %v301 = vmul.f32 %v299, %v225
  %v302 = vsel %vm300, 0.0, %v301
  %303 = vrot.lane.b32.xlu0 %v302, 64
  %v304 = vpop.permute.xlu0 %303
  %v305 = vadd.f32 %v302, %v304
  %306 = vrot.lane.b32.xlu0 %v305, 32
  %v307 = vpop.permute.xlu0 %306
  %v308 = vadd.f32 %v305, %v307
  %v309 = vadd.f32 %v202, %v308
  %vm310 = vcmp.ge.f32.partialorder %v309, 0.0
  %v311 = vsel %vm310, 1.0, -1.0
  %s312 = scalar_lea.vmem %s0, 16
  %v313 = vld [vmem:[%s312] sm:$0xff]
  %315 = vrot.lane.b32.xlu0 %v311, 32
  %v316 = vpop.permute.xlu0 %315
  %318 = vrot.lane.b32.xlu0 %v311, 64
  %v319 = vpop.permute.xlu0 %318
  %321 = vrot.lane.b32.xlu0 %v311, 96
  %v322 = vpop.permute.xlu0 %321
  %v324 = vsel %vm58, %v311, %v316
  %v325 = vsel %vm60, %v324, %v319
  %v326 = vsel %vm62, %v325, %v322
  %v327 = vadd.f32 %v326, %v68
  %v328 = vmul.f32 %v313, %v327
  %v329 = vxor.u32 %v328, 2147483648
  %v330 = vmul.f32 %v329, 1.442695
  %v331 = vpow.pop %v330
  %v332 = vadd.f32 %v331, 1.0
  %v333 = vrcp.pop %v332
  %v334 = vmul.f32 1.0, %v333
  %335 = vmatprep.subr.mxu0 0.0
  %336 = vmatpush1.msra.mxu0 %v78
  %337 = vmatprep.subr.mxu0 0.0
  %338 = vmatpush1.msra.mxu0 %v79
  %339 = vmatprep.subr.mxu0 0.0
  %340 = vmatpush1.msra.mxu0 %v80
  %341 = vmatprep.subr.mxu0 0.0
  %342 = vmatpush1.msra.mxu0 %v81
  %343 = vmatprep.subr.mxu0 0.0
  %344 = vmatpush1.msra.mxu0 %v82
  %345 = vmatprep.subr.mxu0 0.0
  %346 = vmatpush1.msra.mxu0 %v83
  %347 = vmatprep.subr.mxu0 0.0
  %348 = vmatpush1.msra.mxu0 %v84
  %349 = vmatprep.subr.mxu0 0.0
  %350 = vmatpush1.msra.mxu0 %v85
  %351 = vmatprep.subr.mxu0 0.0
  %352 = vmatpush1.msra.mxu0 %v86
  %353 = vmatprep.subr.mxu0 0.0
  %354 = vmatpush1.msra.mxu0 %v87
  %355 = vmatprep.subr.mxu0 0.0
  %356 = vmatpush1.msra.mxu0 %v88
  %357 = vmatprep.subr.mxu0 0.0
  %358 = vmatpush1.msra.mxu0 %v89
  %359 = vmatprep.subr.mxu0 0.0
  %360 = vmatpush1.msra.mxu0 %v90
  %361 = vmatprep.subr.mxu0 0.0
  %362 = vmatpush1.msra.mxu0 %v91
  %363 = vmatprep.subr.mxu0 0.0
  %364 = vmatpush1.msra.mxu0 %v92
  %365 = vmatprep.subr.mxu0 0.0
  %366 = vmatpush1.msra.mxu0 %v93
  %367 = vmatprep.subr.mxu0 0.0
  %368 = vmatpush1.msra.mxu0 %v94
  %369 = vmatprep.subr.mxu0 0.0
  %370 = vmatpush1.msra.mxu0 %v95
  %371 = vmatprep.subr.mxu0 0.0
  %372 = vmatpush1.msra.mxu0 %v96
  %373 = vmatprep.subr.mxu0 0.0
  %374 = vmatpush1.msra.mxu0 %v97
  %375 = vmatprep.subr.mxu0 0.0
  %376 = vmatpush1.msra.mxu0 %v98
  %377 = vmatprep.subr.mxu0 0.0
  %378 = vmatpush1.msra.mxu0 %v99
  %379 = vmatprep.subr.mxu0 0.0
  %380 = vmatpush1.msra.mxu0 %v100
  %381 = vmatprep.subr.mxu0 0.0
  %382 = vmatpush1.msra.mxu0 %v101
  %383 = vmatprep.subr.mxu0 0.0
  %384 = vmatpush1.msra.mxu0 %v102
  %385 = vmatprep.subr.mxu0 0.0
  %386 = vmatpush1.msra.mxu0 %v103
  %387 = vmatprep.subr.mxu0 0.0
  %388 = vmatpush1.msra.mxu0 %v104
  %389 = vmatprep.subr.mxu0 0.0
  %390 = vmatpush1.msra.mxu0 %v105
  %391 = vmatprep.subr.mxu0 0.0
  %392 = vmatpush1.msra.mxu0 %v106
  %393 = vmatprep.subr.mxu0 0.0
  %394 = vmatpush1.msra.mxu0 %v107
  %395 = vmatprep.subr.mxu0 0.0
  %396 = vmatpush1.msra.mxu0 %v108
  %397 = vmatprep.subr.mxu0 0.0
  %398 = vmatpush1.msra.mxu0 %v109
  %399 = vmatprep.mubr.f32.mxu0 %v313
  %400 = vmatmul.mubr.f32.gmra.mrb[0].mxu0 %v326
  %v401 = vpop.f32.mrb[0].mxu0
  %v402 = vadd.f32 %v114, %v401
  %v403 = vpop.f32.mrb[0].mxu0
  %404 = vdwg.mxu0
  %v405 = vmax.f32 %v402, 0.0
  %v406 = vmin.f32 %v402, 0.0
  %v407 = vmul.f32 %v188, %v406
  %v408 = vadd.f32 %v405, %v407
  %vm409 = vcmp.eq.f32.partialorder %v328, 0.0
  %v410 = vmul.f32 %v408, %v334
  %v411 = vsel %vm409, 0.0, %v410
  %412 = vrot.lane.b32.xlu0 %v411, 64
  %v413 = vpop.permute.xlu0 %412
  %v414 = vadd.f32 %v411, %v413
  %415 = vrot.lane.b32.xlu0 %v414, 32
  %v416 = vpop.permute.xlu0 %415
  %v417 = vadd.f32 %v414, %v416
  %v418 = vadd.f32 %v311, %v417
  %vm419 = vcmp.ge.f32.partialorder %v418, 0.0
  %v420 = vsel %vm419, 1.0, -1.0
  %v421 = vld [vmem:[%s5] sm:$0xff]
  %v422 = vld [vmem:[%s5 + $0x8] sm:$0xff]
  %v423 = vld [vmem:[%s5 + $0x10] sm:$0xff]
  %v424 = vld [vmem:[%s5 + $0x18] sm:$0xff]
  %v426 = vsel %vm58, %v420, 0
  %428 = vmatprep.subr.mxu0 0.0
  %429 = vmatpush1.msra.mxu0 %v421
  %430 = vmatprep.subr.mxu0 0.0
  %431 = vmatpush1.msra.mxu0 %v422
  %432 = vmatprep.subr.mxu0 0.0
  %433 = vmatpush1.msra.mxu0 %v423
  %434 = vmatprep.subr.mxu0 0.0
  %435 = vmatpush1.msra.mxu0 %v424
  %436 = vmatprep.subr.mxu0 0.0
  %437 = vmatpush1.msra.mxu0 0.0
  %438 = vmatprep.subr.mxu0 0.0
  %439 = vmatpush1.msra.mxu0 0.0
  %440 = vmatprep.subr.mxu0 0.0
  %441 = vmatpush1.msra.mxu0 0.0
  %442 = vmatprep.subr.mxu0 0.0
  %443 = vmatpush1.msra.mxu0 0.0
  %444 = vmatprep.subr.mxu0 0.0
  %445 = vmatpush1.msra.mxu0 0.0
  %446 = vmatprep.subr.mxu0 0.0
  %447 = vmatpush1.msra.mxu0 0.0
  %448 = vmatprep.subr.mxu0 0.0
  %449 = vmatpush1.msra.mxu0 0.0
  %450 = vmatprep.subr.mxu0 0.0
  %451 = vmatpush1.msra.mxu0 0.0
  %452 = vmatprep.subr.mxu0 0.0
  %453 = vmatpush1.msra.mxu0 0.0
  %454 = vmatprep.subr.mxu0 0.0
  %455 = vmatpush1.msra.mxu0 0.0
  %456 = vmatprep.subr.mxu0 0.0
  %457 = vmatpush1.msra.mxu0 0.0
  %458 = vmatprep.subr.mxu0 0.0
  %459 = vmatpush1.msra.mxu0 0.0
  %460 = vmatprep.subr.mxu0 0.0
  %461 = vmatpush1.msra.mxu0 0.0
  %462 = vmatprep.subr.mxu0 0.0
  %463 = vmatpush1.msra.mxu0 0.0
  %464 = vmatprep.subr.mxu0 0.0
  %465 = vmatpush1.msra.mxu0 0.0
  %466 = vmatprep.subr.mxu0 0.0
  %467 = vmatpush1.msra.mxu0 0.0
  %468 = vmatprep.subr.mxu0 0.0
  %469 = vmatpush1.msra.mxu0 0.0
  %470 = vmatprep.subr.mxu0 0.0
  %471 = vmatpush1.msra.mxu0 0.0
  %472 = vmatprep.subr.mxu0 0.0
  %473 = vmatpush1.msra.mxu0 0.0
  %474 = vmatprep.subr.mxu0 0.0
  %475 = vmatpush1.msra.mxu0 0.0
  %476 = vmatprep.subr.mxu0 0.0
  %477 = vmatpush1.msra.mxu0 0.0
  %478 = vmatprep.subr.mxu0 0.0
  %479 = vmatpush1.msra.mxu0 0.0
  %480 = vmatprep.subr.mxu0 0.0
  %481 = vmatpush1.msra.mxu0 0.0
  %482 = vmatprep.subr.mxu0 0.0
  %483 = vmatpush1.msra.mxu0 0.0
  %484 = vmatprep.subr.mxu0 0.0
  %485 = vmatpush1.msra.mxu0 0.0
  %486 = vmatprep.subr.mxu0 0.0
  %487 = vmatpush1.msra.mxu0 0.0
  %488 = vmatprep.subr.mxu0 0.0
  %489 = vmatpush1.msra.mxu0 0.0
  %490 = vmatprep.subr.mxu0 0.0
  %491 = vmatpush1.msra.mxu0 0.0
  %492 = vmatprep.mubr.f32.mxu0 0.0
  %493 = vmatmul.mubr.f32.gmra.mrb[0].mxu0 %v426
  %v494 = vpop.f32.mrb[0].mxu0
  %v495 = vadd.f32 0.0, %v494
  %v496 = vpop.f32.mrb[0].mxu0
  %497 = vdwg.mxu0
  %v498 = vld [vmem:[%s7] sm:$0xff]
  %v499 = vadd.f32 %v498, %v495
  %v500 = vmax.f32 %v499, 0.0
  %v501 = vmin.f32 %v499, 0.0
  %v502 = vstv %s38
  %v503 = vmul.f32 %v502, %v501
  %v504 = vadd.f32 %v500, %v503
  %v505 = vld [vmem:[%s6] sm:$0xff]
  %v506 = vld [vmem:[%s6 + $0x8] sm:$0xff]
  %v507 = vld [vmem:[%s6 + $0x10] sm:$0xff]
  %v508 = vld [vmem:[%s6 + $0x18] sm:$0xff]
  %v510 = vsel %vm58, %v504, 0
  %512 = vmatprep.subr.mxu0 0.0
  %513 = vmatpush1.msra.mxu0 %v505
  %514 = vmatprep.subr.mxu0 0.0
  %515 = vmatpush1.msra.mxu0 %v506
  %516 = vmatprep.subr.mxu0 0.0
  %517 = vmatpush1.msra.mxu0 %v507
  %518 = vmatprep.subr.mxu0 0.0
  %519 = vmatpush1.msra.mxu0 %v508
  %520 = vmatprep.subr.mxu0 0.0
  %521 = vmatpush1.msra.mxu0 0.0
  %522 = vmatprep.subr.mxu0 0.0
  %523 = vmatpush1.msra.mxu0 0.0
  %524 = vmatprep.subr.mxu0 0.0
  %525 = vmatpush1.msra.mxu0 0.0
  %526 = vmatprep.subr.mxu0 0.0
  %527 = vmatpush1.msra.mxu0 0.0
  %528 = vmatprep.subr.mxu0 0.0
  %529 = vmatpush1.msra.mxu0 0.0
  %530 = vmatprep.subr.mxu0 0.0
  %531 = vmatpush1.msra.mxu0 0.0
  %532 = vmatprep.subr.mxu0 0.0
  %533 = vmatpush1.msra.mxu0 0.0
  %534 = vmatprep.subr.mxu0 0.0
  %535 = vmatpush1.msra.mxu0 0.0
  %536 = vmatprep.subr.mxu0 0.0
  %537 = vmatpush1.msra.mxu0 0.0
  %538 = vmatprep.subr.mxu0 0.0
  %539 = vmatpush1.msra.mxu0 0.0
  %540 = vmatprep.subr.mxu0 0.0
  %541 = vmatpush1.msra.mxu0 0.0
  %542 = vmatprep.subr.mxu0 0.0
  %543 = vmatpush1.msra.mxu0 0.0
  %544 = vmatprep.subr.mxu0 0.0
  %545 = vmatpush1.msra.mxu0 0.0
  %546 = vmatprep.subr.mxu0 0.0
  %547 = vmatpush1.msra.mxu0 0.0
  %548 = vmatprep.subr.mxu0 0.0
  %549 = vmatpush1.msra.mxu0 0.0
  %550 = vmatprep.subr.mxu0 0.0
  %551 = vmatpush1.msra.mxu0 0.0
  %552 = vmatprep.subr.mxu0 0.0
  %553 = vmatpush1.msra.mxu0 0.0
  %554 = vmatprep.subr.mxu0 0.0
  %555 = vmatpush1.msra.mxu0 0.0
  %556 = vmatprep.subr.mxu0 0.0
  %557 = vmatpush1.msra.mxu0 0.0
  %558 = vmatprep.subr.mxu0 0.0
  %559 = vmatpush1.msra.mxu0 0.0
  %560 = vmatprep.subr.mxu0 0.0
  %561 = vmatpush1.msra.mxu0 0.0
  %562 = vmatprep.subr.mxu0 0.0
  %563 = vmatpush1.msra.mxu0 0.0
  %564 = vmatprep.subr.mxu0 0.0
  %565 = vmatpush1.msra.mxu0 0.0
  %566 = vmatprep.subr.mxu0 0.0
  %567 = vmatpush1.msra.mxu0 0.0
  %568 = vmatprep.subr.mxu0 0.0
  %569 = vmatpush1.msra.mxu0 0.0
  %570 = vmatprep.subr.mxu0 0.0
  %571 = vmatpush1.msra.mxu0 0.0
  %572 = vmatprep.subr.mxu0 0.0
  %573 = vmatpush1.msra.mxu0 0.0
  %574 = vmatprep.subr.mxu0 0.0
  %575 = vmatpush1.msra.mxu0 0.0
  %576 = vmatprep.mubr.f32.mxu0 0.0
  %577 = vmatmul.mubr.f32.gmra.mrb[0].mxu0 %v510
  %v578 = vpop.f32.mrb[0].mxu0
  %v579 = vadd.f32 0.0, %v578
  %v580 = vpop.f32.mrb[0].mxu0
  %581 = vdwg.mxu0
  %582 = vst [vmem:[%s10] sm:$0xff] %v579
  // Predicated region
  $region42: #{routed_network_forward.1} parent=0 // pred_check
    _
  $region43: #{routed_network_forward.1} parent=0 // pred_check_branch
    %584 = sbr.rel (0) target = $region45
  $region44: #{routed_network_forward.1} parent=0 // pred_region
    _
  $region45: #{routed_network_forward.1} parent=0 // pred_fallthru
    _
  // Predicated region
  $region46: #{routed_network_forward.1} parent=0 // pred_check
    _
  $region47: #{routed_network_forward.1} parent=0 // pred_check_branch
    %586 = sbr.rel (0) target = $region49
  $region48: #{routed_network_forward.1} parent=0 // pred_region
    _
  $region49: #{routed_network_forward.1} parent=0 // pred_fallthru
    _

</llo_original>
